<compile_context>
chip_gen: v7x
topology: tpu7x:2x2x1
jax: 0.10.0
libtpu: 0.0.40
codegen_flags: <defaults>
</compile_context>

<pallas_src>
import jax
import jax.numpy as jnp
from jax.experimental import pallas as pl
from jax.experimental.pallas import tpu as pltpu


def _discriminator_kernel(x_ref, w1_ref, b1_ref, w2_ref, b2_ref, o_ref):
    """sigmoid(leaky_relu(x @ W1 + b1, 0.2) . w2 + b2) for one batch tile."""
    # ----- Layer 1: (tile, D) @ (D, Hp) on the MXU, f32 accumulation. -----
    h = jnp.dot(x_ref[...], w1_ref[...], preferred_element_type=jnp.float32)
    h = h + b1_ref[...]                                   # (1, Hp) f32 broadcast

    # ----- LeakyReLU(0.2): max(h, 0.2*h) == where(h>0, h, 0.2*h). -----
    h = jnp.maximum(h, 0.2 * h)

    # ----- Layer 2 (out_features == 1). -----
    # Contract Hp between the (1, Hp) w2 row and the (tile, Hp) activations,
    # giving a lane-dense (1, tile) result directly (q @ k.T-style contraction,
    # lowered natively by the MXU).
    # TODO(synk): verify via bundle dump that no (tile, Hp) XLU transpose is
    # emitted for this contraction at batch_tile >= 2048.
    y = jax.lax.dot_general(
        w2_ref[...], h,
        dimension_numbers=(((1,), (1,)), ((), ())),
        preferred_element_type=jnp.float32)               # (1, tile)
    y = y + b2_ref[...]                                   # (1, 1) broadcast

    # ----- Sigmoid: exp on the EUP, approx reciprocal also on the EUP. -----
    o_ref[...] = pl.reciprocal(1.0 + jnp.exp(-y), approx=True).astype(o_ref.dtype)


def _round_up(n, m):
    return ((n + m - 1) // m) * m


def discriminator_forward(x, w1, b1, w2, b2, *, batch_tile=None,
                          core_parallel=False):
    """Fused discriminator forward.

    Args:
      x:  (B, D) activations (bf16 recommended; f32 also supported).
      w1: (D, H) first Linear weight (PyTorch (H, D) transposed).
      b1: (H,)   first Linear bias.
      w2: (H,)   second Linear weight (PyTorch (1, H) squeezed).
      b2: ()/(1,) second Linear bias.
      batch_tile: rows per grid step (multiple of 128); None -> auto (4096,
        shrunk to fit VMEM and capped near B).
      core_parallel: set True on v7x to shard the batch grid axis across the
        two TensorCores (pltpu.CORE_PARALLEL).

    Returns:
      (B, 1) float32 probabilities == sigmoid(leaky_relu(x@w1+b1, 0.2)@w2 + b2).
    """
    B, D = x.shape
    H = w1.shape[1]
    assert w1.shape[0] == D and b1.shape == (H,) and w2.shape == (H,)

    x_itemsize = jnp.dtype(x.dtype).itemsize
    w_itemsize = jnp.dtype(w1.dtype).itemsize
    Hp = _round_up(H, 128)

    # Double-buffered VMEM working set for a given batch tile.
    def working_set_bytes(bt):
        x_buf = bt * D * x_itemsize
        out_buf = bt * 4
        w1_buf = D * Hp * w_itemsize
        small = (2 * Hp + 1) * 4
        return 2 * (x_buf + out_buf + w1_buf + small)

    # ---- Tile selection: large tiles amortize per-grid-step overhead; shrink
    # to a conservative VMEM budget that leaves headroom on v7x (64 MiB phys).
    if batch_tile is None:
        batch_tile = 4096
    assert batch_tile % 128 == 0, "batch_tile must be a multiple of 128"
    batch_tile = max(128, min(batch_tile, _round_up(B, 128)))
    vmem_budget = 40 << 20
    while batch_tile > 128 and working_set_bytes(batch_tile) > vmem_budget:
        batch_tile = max(128, (batch_tile // 2) // 128 * 128)

    n_tiles = pl.cdiv(B, batch_tile)
    Bp_out = n_tiles * batch_tile

    # Pad only the tiny H axis of the params (one-time, off the hot path).
    w1p = jnp.pad(w1, ((0, 0), (0, Hp - H))) if Hp != H else w1
    b1p = jnp.pad(b1.astype(jnp.float32), (0, Hp - H)).reshape(1, Hp)
    w2p = jnp.pad(w2.astype(jnp.float32), (0, Hp - H)).reshape(1, Hp)
    b2p = jnp.asarray(b2, dtype=jnp.float32).reshape(1, 1)

    # x stays unpadded on D (block last dim == full array dim) and, for large
    # batches, unpadded on B (Pallas handles the partial final block; garbage
    # tail rows only touch their own output lanes, sliced off below).  Only
    # when B < batch_tile (small inputs) do we pad the batch axis -- cheap.
    xk = x
    if B < batch_tile:
        xk = jnp.pad(x, ((0, batch_tile - B), (0, 0)))

    # Never set the VMEM limit below the 32 MiB default; add headroom above
    # the computed working set.  Auto-shrink above keeps us inside v7x's 64 MiB.
    vmem_limit = int(max(32 << 20, working_set_bytes(batch_tile) + (8 << 20)))

    cost = pl.CostEstimate(
        flops=2 * B * D * Hp + 2 * B * Hp,
        transcendentals=2 * B,  # exp + approx reciprocal
        bytes_accessed=(B * D * x_itemsize
                        + D * Hp * w_itemsize
                        + (2 * Hp + 1) * 4
                        + Bp_out * 4),
    )

    batch_sem = pltpu.CORE_PARALLEL if core_parallel else "parallel"

    out_row = pl.pallas_call(
        _discriminator_kernel,
        out_shape=jax.ShapeDtypeStruct((1, Bp_out), jnp.float32),
        grid_spec=pltpu.PrefetchScalarGridSpec(
            num_scalar_prefetch=0,
            grid=(n_tiles,),
            in_specs=[
                pl.BlockSpec((batch_tile, D), lambda i: (i, 0)),  # x tile
                pl.BlockSpec((D, Hp), lambda i: (0, 0)),          # W1 (resident)
                pl.BlockSpec((1, Hp), lambda i: (0, 0)),          # b1 row
                pl.BlockSpec((1, Hp), lambda i: (0, 0)),          # w2 row
                pl.BlockSpec((1, 1), lambda i: (0, 0)),           # b2
            ],
            # Lane-dense output: each grid step writes one (1, batch_tile)
            # slice of a single (1, Bp_out) row -> unmasked vector stores.
            out_specs=pl.BlockSpec((1, batch_tile), lambda i: (0, i)),
        ),
        compiler_params=pltpu.CompilerParams(
            dimension_semantics=(batch_sem,),
            vmem_limit_bytes=vmem_limit,
        ),
        cost_estimate=cost,
    )(xk, w1p, b1p, w2p, b2p)

    return out_row.reshape(-1, 1)[:B]


def _reference_forward(x, w1, b1, w2, b2):
    h = x.astype(jnp.float32) @ w1.astype(jnp.float32) + b1
    h = jnp.where(h > 0, h, 0.2 * h)
    y = h @ w2[:, None] + jnp.asarray(b2).reshape(1, 1)
    return jax.nn.sigmoid(y)


if __name__ == "__main__":
    # Small, deliberately unaligned shapes (flattened-image style discriminator)
    # to exercise the padding / partial-block paths: B=300, D=100, H=64.
    B, D, H = 300, 100, 64

    key = jax.random.PRNGKey(0)
    kx, kw1, kb1, kw2, kb2 = jax.random.split(key, 5)

    x = jax.random.normal(kx, (B, D), dtype=jnp.float32)

    # PyTorch Linear parameters, pre-transposed for the kernel:
    #   layer1: weight (H, D) -> stored (D, H); bias (H,)
    #   layer2: weight (1, H) -> stored (H,);   bias (1,)
    w1 = jax.random.normal(kw1, (D, H), dtype=jnp.float32) * 0.1
    b1 = jax.random.normal(kb1, (H,), dtype=jnp.float32) * 0.1
    w2 = jax.random.normal(kw2, (H,), dtype=jnp.float32) * 0.1
    b2 = jax.random.normal(kb2, (1,), dtype=jnp.float32) * 0.1

    # Caller ships bf16 activations / layer-1 weights (halves the dominant
    # HBM stream); all accumulation and element-wise math stays f32 in-kernel.
    x_bf16 = x.astype(jnp.bfloat16)
    w1_bf16 = w1.astype(jnp.bfloat16)

    ref = _reference_forward(x_bf16, w1_bf16, b1, w2, b2)

    # 1) Default (auto) tile: single padded block for this small batch.
    out = discriminator_forward(x_bf16, w1_bf16, b1, w2, b2)
    out = jax.block_until_ready(out)
    assert out.shape == (B, 1)
    assert jnp.allclose(out, ref, atol=2e-3, rtol=2e-3), "mismatch (auto tile)"

    # 2) Explicit small tile: exercises the multi-tile grid with a partial
    #    final block (the code path used for large training batches).
    out2 = discriminator_forward(x_bf16, w1_bf16, b1, w2, b2, batch_tile=128)
    out2 = jax.block_until_ready(out2)
    assert out2.shape == (B, 1)
    assert jnp.allclose(out2, ref, atol=2e-3, rtol=2e-3), "mismatch (tiled)"

    print("KERNEL_OK")
</pallas_src>

<mosaic_0001>
module attributes {stable_mosaic.version = 11 : i64} {
  func.func @_discriminator_kernel(%arg0: i32, %arg1: memref<384x100xbf16, #tpu.memory_space<vmem>>, %arg2: memref<100x128xbf16, #tpu.memory_space<vmem>>, %arg3: memref<1x128xf32, #tpu.memory_space<vmem>>, %arg4: memref<1x128xf32, #tpu.memory_space<vmem>>, %arg5: memref<1x1xf32, #tpu.memory_space<vmem>>, %arg6: memref<1x384xf32, #tpu.memory_space<vmem>>) attributes {dimension_semantics = [#tpu.dimension_semantics<parallel>], iteration_bounds = array<i64: 1>, scalar_prefetch = 0 : i64, scratch_operands = 0 : i64, tpu.core_type = #tpu.core_type<tc>, window_params = [{transform_indices = @transform_0, window_bounds = array<i64: 384, 100>}, {pipeline_mode = #tpu.pipeline_mode<synchronous>, transform_indices = @transform_1, window_bounds = array<i64: 100, 128>}, {pipeline_mode = #tpu.pipeline_mode<synchronous>, transform_indices = @transform_2, window_bounds = array<i64: 1, 128>}, {pipeline_mode = #tpu.pipeline_mode<synchronous>, transform_indices = @transform_3, window_bounds = array<i64: 1, 128>}, {pipeline_mode = #tpu.pipeline_mode<synchronous>, transform_indices = @transform_4, window_bounds = array<i64: 1, 1>}, {transform_indices = @transform_5, window_bounds = array<i64: 1, 384>}]} {
    %c0 = arith.constant 0 : index
    %c0_0 = arith.constant 0 : index
    %0 = vector.load %arg1[%c0, %c0_0] : memref<384x100xbf16, #tpu.memory_space<vmem>>, vector<384x100xbf16>
    %c0_1 = arith.constant 0 : index
    %c0_2 = arith.constant 0 : index
    %1 = vector.load %arg2[%c0_1, %c0_2] : memref<100x128xbf16, #tpu.memory_space<vmem>>, vector<100x128xbf16>
    %cst = arith.constant dense<0.000000e+00> : vector<384x128xf32>
    %2 = tpu.matmul %0, %1, %cst {dimension_numbers = #tpu.dot_dimension_numbers<[1], [0], [0], [1], [0, 0, 1, 1], [], []>} : vector<384x100xbf16>, vector<100x128xbf16>, vector<384x128xf32> -> vector<384x128xf32>
    %c0_3 = arith.constant 0 : index
    %c0_4 = arith.constant 0 : index
    %3 = vector.load %arg3[%c0_3, %c0_4] : memref<1x128xf32, #tpu.memory_space<vmem>>, vector<1x128xf32>
    %4 = vector.broadcast %3 : vector<1x128xf32> to vector<384x128xf32>
    %5 = arith.addf %2, %4 : vector<384x128xf32>
    %cst_5 = arith.constant 2.000000e-01 : f32
    %6 = vector.broadcast %cst_5 : f32 to vector<384x128xf32>
    %7 = arith.mulf %6, %5 : vector<384x128xf32>
    %8 = arith.maximumf %5, %7 : vector<384x128xf32>
    %c0_6 = arith.constant 0 : index
    %c0_7 = arith.constant 0 : index
    %9 = vector.load %arg4[%c0_6, %c0_7] : memref<1x128xf32, #tpu.memory_space<vmem>>, vector<1x128xf32>
    %cst_8 = arith.constant dense<0.000000e+00> : vector<1x384xf32>
    %10 = tpu.matmul %9, %8, %cst_8 {dimension_numbers = #tpu.dot_dimension_numbers<[1], [1], [0], [0], [0, 0, 1, 0], [], []>} : vector<1x128xf32>, vector<384x128xf32>, vector<1x384xf32> -> vector<1x384xf32>
    %c0_9 = arith.constant 0 : index
    %c0_10 = arith.constant 0 : index
    %11 = vector.load %arg5[%c0_9, %c0_10] : memref<1x1xf32, #tpu.memory_space<vmem>>, vector<1x1xf32>
    %12 = vector.broadcast %11 : vector<1x1xf32> to vector<1x384xf32>
    %13 = arith.addf %10, %12 : vector<1x384xf32>
    %cst_11 = arith.constant 0.000000e+00 : f32
    %14 = vector.broadcast %cst_11 : f32 to vector<1x384xf32>
    %15 = arith.subf %14, %13 : vector<1x384xf32>
    %16 = math.exp %15 : vector<1x384xf32>
    %cst_12 = arith.constant 1.000000e+00 : f32
    %17 = vector.broadcast %cst_12 : f32 to vector<1x384xf32>
    %18 = arith.addf %17, %16 : vector<1x384xf32>
    %19 = tpu.reciprocal %18 {approx = true} : vector<1x384xf32> -> vector<1x384xf32>
    %c0_13 = arith.constant 0 : index
    %c0_14 = arith.constant 0 : index
    %20 = vector.load %arg6[%c0_13, %c0_14] : memref<1x384xf32, #tpu.memory_space<vmem>>, vector<1x384xf32>
    tpu.vector_store %arg6[%c0_13, %c0_14], %19 {strides = array<i32>} : memref<1x384xf32, #tpu.memory_space<vmem>>, vector<1x384xf32>,
    return
  }
  func.func @transform_0(%arg0: i32) -> (i32, i32) {
    %c0_i32 = arith.constant 0 : i32
    %c0_i32_0 = arith.constant 0 : i32
    return %arg0, %c0_i32 : i32, i32
  }
  func.func @transform_1(%arg0: i32) -> (i32, i32) {
    %c0_i32 = arith.constant 0 : i32
    %c0_i32_0 = arith.constant 0 : i32
    %c0_i32_1 = arith.constant 0 : i32
    return %c0_i32, %c0_i32_0 : i32, i32
  }
  func.func @transform_2(%arg0: i32) -> (i32, i32) {
    %c0_i32 = arith.constant 0 : i32
    %c0_i32_0 = arith.constant 0 : i32
    %c0_i32_1 = arith.constant 0 : i32
    return %c0_i32, %c0_i32_0 : i32, i32
  }
  func.func @transform_3(%arg0: i32) -> (i32, i32) {
    %c0_i32 = arith.constant 0 : i32
    %c0_i32_0 = arith.constant 0 : i32
    %c0_i32_1 = arith.constant 0 : i32
    return %c0_i32, %c0_i32_0 : i32, i32
  }
  func.func @transform_4(%arg0: i32) -> (i32, i32) {
    %c0_i32 = arith.constant 0 : i32
    %c0_i32_0 = arith.constant 0 : i32
    %c0_i32_1 = arith.constant 0 : i32
    return %c0_i32, %c0_i32_0 : i32, i32
  }
  func.func @transform_5(%arg0: i32) -> (i32, i32) {
    %c0_i32 = arith.constant 0 : i32
    %c0_i32_0 = arith.constant 0 : i32
    return %c0_i32, %arg0 : i32, i32
  }
}

</mosaic_0001>

<llo_original>
// kernel: tpu_custom_call.1
$region0: #{tpu_custom_call.1}
  #allocation0 [shape = 'u32[]', space=smem, size = 0x4, offset = 0x4, fixed_abs, tag = 'smem constant byte address 0x4 - core index']
  #allocation1 [shape = 'u32[144,128]{1,0:T(1,128)}', space=vmem, size = 0x12000, scoped, tag = 'internal scratch']
  #allocation2 [shape = 'f32[1,1]{1,0:T(1,128)S(1)}', space=vmem, size = 0x200, scoped, tag = 'scoped memory for tpu_custom_call.1']
  %s0 = inlined_call_operand.vmem [shape: bf16[384,100], index: 0, kind: input, shape index: {}]
  %s1 = inlined_call_operand.vmem [shape: bf16[100,128], index: 1, kind: input, shape index: {}]
  %s2 = inlined_call_operand.vmem [shape: f32[1,128], index: 2, kind: input, shape index: {}]
  %s3 = inlined_call_operand.vmem [shape: f32[1,128], index: 3, kind: input, shape index: {}]
  %s4 = inlined_call_operand.<no memory space> [shape: f32[1,1], index: 4, kind: input, shape index: {}]
  %s5 = inlined_call_operand.hbm [shape: f32[1,384], index: 5, kind: output, shape index: {}]
  %s6 = sld [smem:[#allocation0]]
  $region30: #{tpu_custom_call.1} parent=0
    _
  %s8 = ssub.s32 1, %s6
  %s9 = scalar_select 0, %s8, %s6
  %v10 = vstv %s4
  %11 = vst [vmem:[#allocation2] sm:$0x1] %v10
  $region1: #{tpu_custom_call.1} parent=0
    #allocation3 [shape = 'u8[1536]{0}', space=vmem, size = 0x800, scoped, tag = 'output window, operand 0, single buffered']
    #allocation4 [shape = 's32[1]{0}', space=sflag, size = 0x4, scoped, tag = 'scoped memory for tpu_custom_call.1']
    %12 = vsyncpa [#allocation4], 0
    // Predicated region
    $region2: #{tpu_custom_call.1} parent=1 // pred_check
      _
    $region3: #{tpu_custom_call.1} parent=1 // pred_check_branch
      %14 = sbr.rel (0) target = $region5
    $region4: #{tpu_custom_call.1} parent=1 // pred_region
      _
    $region5: #{tpu_custom_call.1} parent=1 // pred_fallthru
      _
    // Predicated region
    $region6: #{tpu_custom_call.1} parent=1 // pred_check
      _
    $region7: #{tpu_custom_call.1} parent=1 // pred_check_branch
      %16 = sbr.rel (0) target = $region9
    $region8: #{tpu_custom_call.1} parent=1 // pred_region
      _
    $region9: #{tpu_custom_call.1} parent=1 // pred_fallthru
      _
    // Predicated region
    $region10: #{tpu_custom_call.1} parent=1 // pred_check
      _
    $region11: #{tpu_custom_call.1} parent=1 // pred_check_branch
      %18 = sbr.rel (0) target = $region13
    $region12: #{tpu_custom_call.1} parent=1 // pred_region
      _
    $region13: #{tpu_custom_call.1} parent=1 // pred_fallthru
      _
    // Predicated region
    $region14: #{tpu_custom_call.1} parent=1 // pred_check
      _
    $region15: #{tpu_custom_call.1} parent=1 // pred_check_branch
      %20 = sbr.rel (0) target = $region17
    $region16: #{tpu_custom_call.1} parent=1 // pred_region
      _
    $region17: #{tpu_custom_call.1} parent=1 // pred_fallthru
      _
    // Predicated region
    $region18: #{tpu_custom_call.1} parent=1 // pred_check
      _
    $region19: #{tpu_custom_call.1} parent=1 // pred_check_branch
      %22 = sbr.rel (0) target = $region21
    $region20: #{tpu_custom_call.1} parent=1 // pred_region
      _
    $region21: #{tpu_custom_call.1} parent=1 // pred_fallthru
      _
    %v24 = vld [vmem:[%s0] sm:$0xf]
    %v25 = vld [vmem:[%s0 + $0x4] sm:$0xf]
    %v26 = vld [vmem:[%s0 + $0x8] sm:$0xf]
    %v27 = vld [vmem:[%s0 + $0xc] sm:$0xf]
    %v28 = vld [vmem:[%s0 + $0x10] sm:$0xf]
    %v29 = vld [vmem:[%s0 + $0x14] sm:$0xf]
    %v30 = vld [vmem:[%s0 + $0x18] sm:$0xf]
    %v31 = vld [vmem:[%s0 + $0x1c] sm:$0xf]
    %v32 = vld [vmem:[%s0 + $0x20] sm:$0xf]
    %v33 = vld [vmem:[%s0 + $0x24] sm:$0xf]
    %v34 = vld [vmem:[%s0 + $0x28] sm:$0xf]
    %v35 = vld [vmem:[%s0 + $0x2c] sm:$0xf]
    %v36 = vld [vmem:[%s0 + $0x30] sm:$0xf]
    %v37 = vld [vmem:[%s0 + $0x34] sm:$0xf]
    %v38 = vld [vmem:[%s0 + $0x38] sm:$0xf]
    %v39 = vld [vmem:[%s0 + $0x3c] sm:$0xf]
    %v40 = vld [vmem:[%s0 + $0x40] sm:$0xf]
    %v41 = vld [vmem:[%s0 + $0x44] sm:$0xf]
    %v42 = vld [vmem:[%s0 + $0x48] sm:$0xf]
    %v43 = vld [vmem:[%s0 + $0x4c] sm:$0xf]
    %v44 = vld [vmem:[%s0 + $0x50] sm:$0xf]
    %v45 = vld [vmem:[%s0 + $0x54] sm:$0xf]
    %v46 = vld [vmem:[%s0 + $0x58] sm:$0xf]
    %v47 = vld [vmem:[%s0 + $0x5c] sm:$0xf]
    %v48 = vld [vmem:[%s0 + $0x60] sm:$0xf]
    %v49 = vld [vmem:[%s0 + $0x64] sm:$0xf]
    %v50 = vld [vmem:[%s0 + $0x68] sm:$0xf]
    %v51 = vld [vmem:[%s0 + $0x6c] sm:$0xf]
    %v52 = vld [vmem:[%s0 + $0x70] sm:$0xf]
    %v53 = vld [vmem:[%s0 + $0x74] sm:$0xf]
    %v54 = vld [vmem:[%s0 + $0x78] sm:$0xf]
    %v55 = vld [vmem:[%s0 + $0x7c] sm:$0xf]
    %v56 = vld [vmem:[%s0 + $0x80] sm:$0xf]
    %v57 = vld [vmem:[%s0 + $0x84] sm:$0xf]
    %v58 = vld [vmem:[%s0 + $0x88] sm:$0xf]
    %v59 = vld [vmem:[%s0 + $0x8c] sm:$0xf]
    %v60 = vld [vmem:[%s0 + $0x90] sm:$0xf]
    %v61 = vld [vmem:[%s0 + $0x94] sm:$0xf]
    %v62 = vld [vmem:[%s0 + $0x98] sm:$0xf]
    %v63 = vld [vmem:[%s0 + $0x9c] sm:$0xf]
    %v64 = vld [vmem:[%s0 + $0xa0] sm:$0xf]
    %v65 = vld [vmem:[%s0 + $0xa4] sm:$0xf]
    %v66 = vld [vmem:[%s0 + $0xa8] sm:$0xf]
    %v67 = vld [vmem:[%s0 + $0xac] sm:$0xf]
    %v68 = vld [vmem:[%s0 + $0xb0] sm:$0xf]
    %v69 = vld [vmem:[%s0 + $0xb4] sm:$0xf]
    %v70 = vld [vmem:[%s0 + $0xb8] sm:$0xf]
    %v71 = vld [vmem:[%s0 + $0xbc] sm:$0xf]
    %v72 = vld [vmem:[%s1] sm:$0xf]
    %v73 = vld [vmem:[%s1 + $0x4] sm:$0xf]
    %v74 = vld [vmem:[%s1 + $0x8] sm:$0xf]
    %v75 = vld [vmem:[%s1 + $0xc] sm:$0xf]
    %v76 = vld [vmem:[%s1 + $0x10] sm:$0xf]
    %v77 = vld [vmem:[%s1 + $0x14] sm:$0xf]
    %v78 = vld [vmem:[%s1 + $0x18] sm:$0xf]
    %v79 = vld [vmem:[%s1 + $0x1c] sm:$0xf]
    %v80 = vld [vmem:[%s1 + $0x20] sm:$0xf]
    %v81 = vld [vmem:[%s1 + $0x24] sm:$0xf]
    %v82 = vld [vmem:[%s1 + $0x28] sm:$0xf]
    %v83 = vld [vmem:[%s1 + $0x2c] sm:$0xf]
    %v84 = vld [vmem:[%s1 + $0x30] sm:$0x3]
    %v85 = vld [vmem:[%s2] sm:$0x1]
    %v87 = vlaneseq
    %v88 = vshrl.u32 %v87, 7
    %v89 = vsub.s32 0, %v88
    %v90 = vrot.slane %v85, %v89
    %v140 = vunpack.c.l.b16 %v24
    %v141 = vunpack.c.l.b16 %v25
    %v142 = vunpack.c.l.b16 %v26
    %v143 = vunpack.c.l.b16 %v27
    %v144 = vunpack.c.l.b16 %v28
    %v145 = vunpack.c.l.b16 %v29
    %v146 = vunpack.c.l.b16 %v30
    %v147 = vunpack.c.l.b16 %v31
    %v148 = vunpack.c.l.b16 %v32
    %v149 = vunpack.c.l.b16 %v33
    %v150 = vunpack.c.l.b16 %v34
    %v151 = vunpack.c.l.b16 %v35
    %v152 = vunpack.c.l.b16 %v36
    %v153 = vunpack.c.l.b16 %v37
    %v154 = vunpack.c.l.b16 %v38
    %v155 = vunpack.c.l.b16 %v39
    %v156 = vunpack.c.l.b16 %v40
    %v157 = vunpack.c.l.b16 %v41
    %v158 = vunpack.c.l.b16 %v42
    %v159 = vunpack.c.l.b16 %v43
    %v160 = vunpack.c.l.b16 %v44
    %v161 = vunpack.c.l.b16 %v45
    %v162 = vunpack.c.l.b16 %v46
    %v163 = vunpack.c.l.b16 %v47
    %v164 = vunpack.c.l.b16 %v48
    %v165 = vunpack.c.l.b16 %v49
    %v166 = vunpack.c.l.b16 %v50
    %v167 = vunpack.c.l.b16 %v51
    %v168 = vunpack.c.l.b16 %v52
    %v169 = vunpack.c.l.b16 %v53
    %v170 = vunpack.c.l.b16 %v54
    %v171 = vunpack.c.l.b16 %v55
    %v172 = vunpack.c.l.b16 %v56
    %v173 = vunpack.c.l.b16 %v57
    %v174 = vunpack.c.l.b16 %v58
    %v175 = vunpack.c.l.b16 %v59
    %v176 = vunpack.c.l.b16 %v60
    %v177 = vunpack.c.l.b16 %v61
    %v178 = vunpack.c.l.b16 %v62
    %v179 = vunpack.c.l.b16 %v63
    %v180 = vunpack.c.l.b16 %v64
    %v181 = vunpack.c.l.b16 %v65
    %v182 = vunpack.c.l.b16 %v66
    %v183 = vunpack.c.l.b16 %v67
    %v184 = vunpack.c.l.b16 %v68
    %v185 = vunpack.c.l.b16 %v69
    %v186 = vunpack.c.l.b16 %v70
    %v187 = vunpack.c.l.b16 %v71
    %v188 = vpack.c.b16 %v141, %v140
    %v189 = vpack.c.b16 %v143, %v142
    %v190 = vpack.c.b16 %v145, %v144
    %v191 = vpack.c.b16 %v147, %v146
    %v192 = vpack.c.b16 %v149, %v148
    %v193 = vpack.c.b16 %v151, %v150
    %v194 = vpack.c.b16 %v153, %v152
    %v195 = vpack.c.b16 %v155, %v154
    %v196 = vpack.c.b16 %v157, %v156
    %v197 = vpack.c.b16 %v159, %v158
    %v198 = vpack.c.b16 %v161, %v160
    %v199 = vpack.c.b16 %v163, %v162
    %v200 = vpack.c.b16 %v165, %v164
    %v201 = vpack.c.b16 %v167, %v166
    %v202 = vpack.c.b16 %v169, %v168
    %v203 = vpack.c.b16 %v171, %v170
    %v204 = vpack.c.b16 %v173, %v172
    %v205 = vpack.c.b16 %v175, %v174
    %v206 = vpack.c.b16 %v177, %v176
    %v207 = vpack.c.b16 %v179, %v178
    %v208 = vpack.c.b16 %v181, %v180
    %v209 = vpack.c.b16 %v183, %v182
    %v210 = vpack.c.b16 %v185, %v184
    %v211 = vpack.c.b16 %v187, %v186
    %v225 = vunpack.c.l.b16 %v72
    %v226 = vunpack.c.l.b16 %v73
    %v227 = vunpack.c.l.b16 %v74
    %v228 = vunpack.c.l.b16 %v75
    %v229 = vunpack.c.l.b16 %v76
    %v230 = vunpack.c.l.b16 %v77
    %v231 = vunpack.c.l.b16 %v78
    %v232 = vunpack.c.l.b16 %v79
    %v233 = vunpack.c.l.b16 %v80
    %v234 = vunpack.c.l.b16 %v81
    %v235 = vunpack.c.l.b16 %v82
    %v236 = vunpack.c.l.b16 %v83
    %v237 = vunpack.c.l.b16 %v84
    %v238 = vpack.c.b16 %v226, %v225
    %v239 = vpack.c.b16 %v228, %v227
    %v240 = vpack.c.b16 %v230, %v229
    %v241 = vpack.c.b16 %v232, %v231
    %v242 = vpack.c.b16 %v234, %v233
    %v243 = vpack.c.b16 %v236, %v235
    %v244 = vpack.c.b16 %v237, %v237
    %vm251 = vcmask 818176
    %v253 = vsel %vm251, %v188, 0
    %v256 = vsel %vm251, %v189, 0
    %v259 = vsel %vm251, %v190, 0
    %v262 = vsel %vm251, %v191, 0
    %v265 = vsel %vm251, %v192, 0
    %v268 = vsel %vm251, %v193, 0
    %v271 = vsel %vm251, %v194, 0
    %v274 = vsel %vm251, %v195, 0
    %v277 = vsel %vm251, %v196, 0
    %v280 = vsel %vm251, %v197, 0
    %v283 = vsel %vm251, %v198, 0
    %v286 = vsel %vm251, %v199, 0
    %v289 = vsel %vm251, %v200, 0
    %v292 = vsel %vm251, %v201, 0
    %v295 = vsel %vm251, %v202, 0
    %v298 = vsel %vm251, %v203, 0
    %v301 = vsel %vm251, %v204, 0
    %v304 = vsel %vm251, %v205, 0
    %v307 = vsel %vm251, %v206, 0
    %v310 = vsel %vm251, %v207, 0
    %v313 = vsel %vm251, %v208, 0
    %v316 = vsel %vm251, %v209, 0
    %v319 = vsel %vm251, %v210, 0
    %v322 = vsel %vm251, %v211, 0
    %vm324 = vcmask 1041408
    %v326 = vsel %vm324, %v244, 0
    %328 = vmatprep.subr.bf16.mxu0 0
    %329 = vmatpush1.bf16.msra.mxu0 %v238
    %330 = vmatprep.subr.bf16.mxu0 0
    %331 = vmatpush1.bf16.msra.mxu0 %v239
    %332 = vmatprep.subr.bf16.mxu0 0
    %333 = vmatpush1.bf16.msra.mxu0 %v240
    %334 = vmatprep.subr.bf16.mxu0 0
    %335 = vmatpush1.bf16.msra.mxu0 %v241
    %336 = vmatprep.subr.bf16.mxu0 0
    %337 = vmatpush1.bf16.msra.mxu0 %v242
    %338 = vmatprep.subr.bf16.mxu0 0
    %339 = vmatpush1.bf16.msra.mxu0 %v243
    %340 = vmatprep.subr.bf16.mxu0 0
    %341 = vmatpush1.bf16.msra.mxu0 %v326
    %342 = vmatprep.subr.bf16.mxu0 0
    %343 = vmatpush1.bf16.msra.mxu0 0
    %344 = vmatprep.subr.bf16.mxu0 0
    %345 = vmatpush1.bf16.msra.mxu0 0
    %346 = vmatprep.subr.bf16.mxu0 0
    %347 = vmatpush1.bf16.msra.mxu0 0
    %348 = vmatprep.subr.bf16.mxu0 0
    %349 = vmatpush1.bf16.msra.mxu0 0
    %350 = vmatprep.subr.bf16.mxu0 0
    %351 = vmatpush1.bf16.msra.mxu0 0
    %352 = vmatprep.subr.bf16.mxu0 0
    %353 = vmatpush1.bf16.msra.mxu0 0
    %354 = vmatprep.subr.bf16.mxu0 0
    %355 = vmatpush1.bf16.msra.mxu0 0
    %356 = vmatprep.subr.bf16.mxu0 0
    %357 = vmatpush1.bf16.msra.mxu0 0
    %358 = vmatprep.subr.bf16.mxu0 0
    %359 = vmatpush1.bf16.msra.mxu0 0
    %360 = vmatprep.mubr.bf16.mxu0 0
    %361 = vmatmul.mubr.bf16.gmra.mrb[0].mxu0 %v253
    %v362 = vpop.f32.mrb[0].mxu0
    %v363 = vadd.f32 %v90, %v362
    %v364 = vpop.f32.mrb[0].mxu0
    %v365 = vpop.f32.mrb[0].mxu0
    %v366 = vadd.f32 %v90, %v365
    %v367 = vpop.f32.mrb[0].mxu0
    %368 = vmatprep.mubr.bf16.mxu0 0
    %369 = vmatmul.mubr.bf16.gmra.mrb[0].mxu0 %v256
    %v370 = vpop.f32.mrb[0].mxu0
    %v371 = vadd.f32 %v90, %v370
    %v372 = vpop.f32.mrb[0].mxu0
    %v373 = vpop.f32.mrb[0].mxu0
    %v374 = vadd.f32 %v90, %v373
    %v375 = vpop.f32.mrb[0].mxu0
    %376 = vmatprep.mubr.bf16.mxu0 0
    %377 = vmatmul.mubr.bf16.gmra.mrb[0].mxu0 %v259
    %v378 = vpop.f32.mrb[0].mxu0
    %v379 = vadd.f32 %v90, %v378
    %v380 = vpop.f32.mrb[0].mxu0
    %v381 = vpop.f32.mrb[0].mxu0
    %v382 = vadd.f32 %v90, %v381
    %v383 = vpop.f32.mrb[0].mxu0
    %384 = vmatprep.mubr.bf16.mxu0 0
    %385 = vmatmul.mubr.bf16.gmra.mrb[0].mxu0 %v262
    %v386 = vpop.f32.mrb[0].mxu0
    %v387 = vadd.f32 %v90, %v386
    %v388 = vpop.f32.mrb[0].mxu0
    %v389 = vpop.f32.mrb[0].mxu0
    %v390 = vadd.f32 %v90, %v389
    %v391 = vpop.f32.mrb[0].mxu0
    %392 = vmatprep.mubr.bf16.mxu0 0
    %393 = vmatmul.mubr.bf16.gmra.mrb[0].mxu0 %v265
    %v394 = vpop.f32.mrb[0].mxu0
    %v395 = vadd.f32 %v90, %v394
    %v396 = vpop.f32.mrb[0].mxu0
    %v397 = vpop.f32.mrb[0].mxu0
    %v398 = vadd.f32 %v90, %v397
    %v399 = vpop.f32.mrb[0].mxu0
    %400 = vmatprep.mubr.bf16.mxu0 0
    %401 = vmatmul.mubr.bf16.gmra.mrb[0].mxu0 %v268
    %v402 = vpop.f32.mrb[0].mxu0
    %v403 = vadd.f32 %v90, %v402
    %v404 = vpop.f32.mrb[0].mxu0
    %v405 = vpop.f32.mrb[0].mxu0
    %v406 = vadd.f32 %v90, %v405
    %v407 = vpop.f32.mrb[0].mxu0
    %408 = vmatprep.mubr.bf16.mxu0 0
    %409 = vmatmul.mubr.bf16.gmra.mrb[0].mxu0 %v271
    %v410 = vpop.f32.mrb[0].mxu0
    %v411 = vadd.f32 %v90, %v410
    %v412 = vpop.f32.mrb[0].mxu0
    %v413 = vpop.f32.mrb[0].mxu0
    %v414 = vadd.f32 %v90, %v413
    %v415 = vpop.f32.mrb[0].mxu0
    %416 = vmatprep.mubr.bf16.mxu0 0
    %417 = vmatmul.mubr.bf16.gmra.mrb[0].mxu0 %v274
    %v418 = vpop.f32.mrb[0].mxu0
    %v419 = vadd.f32 %v90, %v418
    %v420 = vpop.f32.mrb[0].mxu0
    %v421 = vpop.f32.mrb[0].mxu0
    %v422 = vadd.f32 %v90, %v421
    %v423 = vpop.f32.mrb[0].mxu0
    %424 = vmatprep.mubr.bf16.mxu0 0
    %425 = vmatmul.mubr.bf16.gmra.mrb[0].mxu0 %v277
    %v426 = vpop.f32.mrb[0].mxu0
    %v427 = vadd.f32 %v90, %v426
    %v428 = vpop.f32.mrb[0].mxu0
    %v429 = vpop.f32.mrb[0].mxu0
    %v430 = vadd.f32 %v90, %v429
    %v431 = vpop.f32.mrb[0].mxu0
    %432 = vmatprep.mubr.bf16.mxu0 0
    %433 = vmatmul.mubr.bf16.gmra.mrb[0].mxu0 %v280
    %v434 = vpop.f32.mrb[0].mxu0
    %v435 = vadd.f32 %v90, %v434
    %v436 = vpop.f32.mrb[0].mxu0
    %v437 = vpop.f32.mrb[0].mxu0
    %v438 = vadd.f32 %v90, %v437
    %v439 = vpop.f32.mrb[0].mxu0
    %440 = vmatprep.mubr.bf16.mxu0 0
    %441 = vmatmul.mubr.bf16.gmra.mrb[0].mxu0 %v283
    %v442 = vpop.f32.mrb[0].mxu0
    %v443 = vadd.f32 %v90, %v442
    %v444 = vpop.f32.mrb[0].mxu0
    %v445 = vpop.f32.mrb[0].mxu0
    %v446 = vadd.f32 %v90, %v445
    %v447 = vpop.f32.mrb[0].mxu0
    %448 = vmatprep.mubr.bf16.mxu0 0
    %449 = vmatmul.mubr.bf16.gmra.mrb[0].mxu0 %v286
    %v450 = vpop.f32.mrb[0].mxu0
    %v451 = vadd.f32 %v90, %v450
    %v452 = vpop.f32.mrb[0].mxu0
    %v453 = vpop.f32.mrb[0].mxu0
    %v454 = vadd.f32 %v90, %v453
    %v455 = vpop.f32.mrb[0].mxu0
    %456 = vmatprep.mubr.bf16.mxu0 0
    %457 = vmatmul.mubr.bf16.gmra.mrb[0].mxu0 %v289
    %v458 = vpop.f32.mrb[0].mxu0
    %v459 = vadd.f32 %v90, %v458
    %v460 = vpop.f32.mrb[0].mxu0
    %v461 = vpop.f32.mrb[0].mxu0
    %v462 = vadd.f32 %v90, %v461
    %v463 = vpop.f32.mrb[0].mxu0
    %464 = vmatprep.mubr.bf16.mxu0 0
    %465 = vmatmul.mubr.bf16.gmra.mrb[0].mxu0 %v292
    %v466 = vpop.f32.mrb[0].mxu0
    %v467 = vadd.f32 %v90, %v466
    %v468 = vpop.f32.mrb[0].mxu0
    %v469 = vpop.f32.mrb[0].mxu0
    %v470 = vadd.f32 %v90, %v469
    %v471 = vpop.f32.mrb[0].mxu0
    %472 = vmatprep.mubr.bf16.mxu0 0
    %473 = vmatmul.mubr.bf16.gmra.mrb[0].mxu0 %v295
    %v474 = vpop.f32.mrb[0].mxu0
    %v475 = vadd.f32 %v90, %v474
    %v476 = vpop.f32.mrb[0].mxu0
    %v477 = vpop.f32.mrb[0].mxu0
    %v478 = vadd.f32 %v90, %v477
    %v479 = vpop.f32.mrb[0].mxu0
    %480 = vmatprep.mubr.bf16.mxu0 0
    %481 = vmatmul.mubr.bf16.gmra.mrb[0].mxu0 %v298
    %v482 = vpop.f32.mrb[0].mxu0
    %v483 = vadd.f32 %v90, %v482
    %v484 = vpop.f32.mrb[0].mxu0
    %v485 = vpop.f32.mrb[0].mxu0
    %v486 = vadd.f32 %v90, %v485
    %v487 = vpop.f32.mrb[0].mxu0
    %488 = vmatprep.mubr.bf16.mxu0 0
    %489 = vmatmul.mubr.bf16.gmra.mrb[0].mxu0 %v301
    %v490 = vpop.f32.mrb[0].mxu0
    %v491 = vadd.f32 %v90, %v490
    %v492 = vpop.f32.mrb[0].mxu0
    %v493 = vpop.f32.mrb[0].mxu0
    %v494 = vadd.f32 %v90, %v493
    %v495 = vpop.f32.mrb[0].mxu0
    %496 = vmatprep.mubr.bf16.mxu0 0
    %497 = vmatmul.mubr.bf16.gmra.mrb[0].mxu0 %v304
    %v498 = vpop.f32.mrb[0].mxu0
    %v499 = vadd.f32 %v90, %v498
    %v500 = vpop.f32.mrb[0].mxu0
    %v501 = vpop.f32.mrb[0].mxu0
    %v502 = vadd.f32 %v90, %v501
    %v503 = vpop.f32.mrb[0].mxu0
    %504 = vmatprep.mubr.bf16.mxu0 0
    %505 = vmatmul.mubr.bf16.gmra.mrb[0].mxu0 %v307
    %v506 = vpop.f32.mrb[0].mxu0
    %v507 = vadd.f32 %v90, %v506
    %v508 = vpop.f32.mrb[0].mxu0
    %v509 = vpop.f32.mrb[0].mxu0
    %v510 = vadd.f32 %v90, %v509
    %v511 = vpop.f32.mrb[0].mxu0
    %512 = vmatprep.mubr.bf16.mxu0 0
    %513 = vmatmul.mubr.bf16.gmra.mrb[0].mxu0 %v310
    %v514 = vpop.f32.mrb[0].mxu0
    %v515 = vadd.f32 %v90, %v514
    %v516 = vpop.f32.mrb[0].mxu0
    %v517 = vpop.f32.mrb[0].mxu0
    %v518 = vadd.f32 %v90, %v517
    %v519 = vpop.f32.mrb[0].mxu0
    %520 = vmatprep.mubr.bf16.mxu0 0
    %521 = vmatmul.mubr.bf16.gmra.mrb[0].mxu0 %v313
    %v522 = vpop.f32.mrb[0].mxu0
    %v523 = vadd.f32 %v90, %v522
    %v524 = vpop.f32.mrb[0].mxu0
    %v525 = vpop.f32.mrb[0].mxu0
    %v526 = vadd.f32 %v90, %v525
    %v527 = vpop.f32.mrb[0].mxu0
    %528 = vmatprep.mubr.bf16.mxu0 0
    %529 = vmatmul.mubr.bf16.gmra.mrb[0].mxu0 %v316
    %v530 = vpop.f32.mrb[0].mxu0
    %v531 = vadd.f32 %v90, %v530
    %v532 = vpop.f32.mrb[0].mxu0
    %v533 = vpop.f32.mrb[0].mxu0
    %v534 = vadd.f32 %v90, %v533
    %v535 = vpop.f32.mrb[0].mxu0
    %536 = vmatprep.mubr.bf16.mxu0 0
    %537 = vmatmul.mubr.bf16.gmra.mrb[0].mxu0 %v319
    %v538 = vpop.f32.mrb[0].mxu0
    %v539 = vadd.f32 %v90, %v538
    %v540 = vpop.f32.mrb[0].mxu0
    %v541 = vpop.f32.mrb[0].mxu0
    %v542 = vadd.f32 %v90, %v541
    %v543 = vpop.f32.mrb[0].mxu0
    %544 = vmatprep.mubr.bf16.mxu0 0
    %545 = vmatmul.mubr.bf16.gmra.mrb[0].mxu0 %v322
    %v546 = vpop.f32.mrb[0].mxu0
    %v547 = vadd.f32 %v90, %v546
    %v548 = vpop.f32.mrb[0].mxu0
    %v549 = vpop.f32.mrb[0].mxu0
    %v550 = vadd.f32 %v90, %v549
    %v551 = vpop.f32.mrb[0].mxu0
    %552 = vdwg.mxu0
    %v553 = vmul.f32 %v363, 0.2
    %v554 = vmul.f32 %v366, 0.2
    %v555 = vmul.f32 %v371, 0.2
    %v556 = vmul.f32 %v374, 0.2
    %v557 = vmul.f32 %v379, 0.2
    %v558 = vmul.f32 %v382, 0.2
    %v559 = vmul.f32 %v387, 0.2
    %v560 = vmul.f32 %v390, 0.2
    %v561 = vmul.f32 %v395, 0.2
    %v562 = vmul.f32 %v398, 0.2
    %v563 = vmul.f32 %v403, 0.2
    %v564 = vmul.f32 %v406, 0.2
    %v565 = vmul.f32 %v411, 0.2
    %v566 = vmul.f32 %v414, 0.2
    %v567 = vmul.f32 %v419, 0.2
    %v568 = vmul.f32 %v422, 0.2
    %v569 = vmul.f32 %v427, 0.2
    %v570 = vmul.f32 %v430, 0.2
    %v571 = vmul.f32 %v435, 0.2
    %v572 = vmul.f32 %v438, 0.2
    %v573 = vmul.f32 %v443, 0.2
    %v574 = vmul.f32 %v446, 0.2
    %v575 = vmul.f32 %v451, 0.2
    %v576 = vmul.f32 %v454, 0.2
    %v577 = vmul.f32 %v459, 0.2
    %v578 = vmul.f32 %v462, 0.2
    %v579 = vmul.f32 %v467, 0.2
    %v580 = vmul.f32 %v470, 0.2
    %v581 = vmul.f32 %v475, 0.2
    %v582 = vmul.f32 %v478, 0.2
    %v583 = vmul.f32 %v483, 0.2
    %v584 = vmul.f32 %v486, 0.2
    %v585 = vmul.f32 %v491, 0.2
    %v586 = vmul.f32 %v494, 0.2
    %v587 = vmul.f32 %v499, 0.2
    %v588 = vmul.f32 %v502, 0.2
    %v589 = vmul.f32 %v507, 0.2
    %v590 = vmul.f32 %v510, 0.2
    %v591 = vmul.f32 %v515, 0.2
    %v592 = vmul.f32 %v518, 0.2
    %v593 = vmul.f32 %v523, 0.2
    %v594 = vmul.f32 %v526, 0.2
    %v595 = vmul.f32 %v531, 0.2
    %v596 = vmul.f32 %v534, 0.2
    %v597 = vmul.f32 %v539, 0.2
    %v598 = vmul.f32 %v542, 0.2
    %v599 = vmul.f32 %v547, 0.2
    %v600 = vmul.f32 %v550, 0.2
    %v601 = vmax.f32 %v363, %v553
    %v602 = vmax.f32 %v366, %v554
    %v603 = vmax.f32 %v371, %v555
    %v604 = vmax.f32 %v374, %v556
    %v605 = vmax.f32 %v379, %v557
    %v606 = vmax.f32 %v382, %v558
    %v607 = vmax.f32 %v387, %v559
    %v608 = vmax.f32 %v390, %v560
    %v609 = vmax.f32 %v395, %v561
    %v610 = vmax.f32 %v398, %v562
    %v611 = vmax.f32 %v403, %v563
    %v612 = vmax.f32 %v406, %v564
    %v613 = vmax.f32 %v411, %v565
    %v614 = vmax.f32 %v414, %v566
    %v615 = vmax.f32 %v419, %v567
    %v616 = vmax.f32 %v422, %v568
    %v617 = vmax.f32 %v427, %v569
    %v618 = vmax.f32 %v430, %v570
    %v619 = vmax.f32 %v435, %v571
    %v620 = vmax.f32 %v438, %v572
    %v621 = vmax.f32 %v443, %v573
    %v622 = vmax.f32 %v446, %v574
    %v623 = vmax.f32 %v451, %v575
    %v624 = vmax.f32 %v454, %v576
    %v625 = vmax.f32 %v459, %v577
    %v626 = vmax.f32 %v462, %v578
    %v627 = vmax.f32 %v467, %v579
    %v628 = vmax.f32 %v470, %v580
    %v629 = vmax.f32 %v475, %v581
    %v630 = vmax.f32 %v478, %v582
    %v631 = vmax.f32 %v483, %v583
    %v632 = vmax.f32 %v486, %v584
    %v633 = vmax.f32 %v491, %v585
    %v634 = vmax.f32 %v494, %v586
    %v635 = vmax.f32 %v499, %v587
    %v636 = vmax.f32 %v502, %v588
    %v637 = vmax.f32 %v507, %v589
    %v638 = vmax.f32 %v510, %v590
    %v639 = vmax.f32 %v515, %v591
    %v640 = vmax.f32 %v518, %v592
    %v641 = vmax.f32 %v523, %v593
    %v642 = vmax.f32 %v526, %v594
    %v643 = vmax.f32 %v531, %v595
    %v644 = vmax.f32 %v534, %v596
    %v645 = vmax.f32 %v539, %v597
    %v646 = vmax.f32 %v542, %v598
    %v647 = vmax.f32 %v547, %v599
    %v648 = vmax.f32 %v550, %v600
    %v649 = vld [vmem:[%s3] sm:$0x1]
    %v650 = vld [vmem:[#allocation2] sm:$0x1]
    %652 = vset.pattern.permute.xlu0 0
    %653 = vperm.xlu0 %652, %v650
    %v654 = vpop.permute.xlu0 %653
    %v656 = vlaneseq
    %v657 = vshrl.u32 %v656, 7
    %v658 = vsub.s32 0, %v657
    %v659 = vrot.slane %v654, %v658
    %660 = vmatprep.subr.mxu0 0.0
    %661 = vmatpush1.xpose.msra.mxu0 %v601
    %662 = vmatprep.subr.mxu0 0.0
    %663 = vmatpush1.xpose.msra.mxu0 %v602
    %664 = vmatprep.subr.mxu0 0.0
    %665 = vmatpush1.xpose.msra.mxu0 %v603
    %666 = vmatprep.subr.mxu0 0.0
    %667 = vmatpush1.xpose.msra.mxu0 %v604
    %668 = vmatprep.subr.mxu0 0.0
    %669 = vmatpush1.xpose.msra.mxu0 %v605
    %670 = vmatprep.subr.mxu0 0.0
    %671 = vmatpush1.xpose.msra.mxu0 %v606
    %672 = vmatprep.subr.mxu0 0.0
    %673 = vmatpush1.xpose.msra.mxu0 %v607
    %674 = vmatprep.subr.mxu0 0.0
    %675 = vmatpush1.xpose.msra.mxu0 %v608
    %676 = vmatprep.subr.mxu0 0.0
    %677 = vmatpush1.xpose.msra.mxu0 %v609
    %678 = vmatprep.subr.mxu0 0.0
    %679 = vmatpush1.xpose.msra.mxu0 %v610
    %680 = vmatprep.subr.mxu0 0.0
    %681 = vmatpush1.xpose.msra.mxu0 %v611
    %682 = vmatprep.subr.mxu0 0.0
    %683 = vmatpush1.xpose.msra.mxu0 %v612
    %684 = vmatprep.subr.mxu0 0.0
    %685 = vmatpush1.xpose.msra.mxu0 %v613
    %686 = vmatprep.subr.mxu0 0.0
    %687 = vmatpush1.xpose.msra.mxu0 %v614
    %688 = vmatprep.subr.mxu0 0.0
    %689 = vmatpush1.xpose.msra.mxu0 %v615
    %690 = vmatprep.subr.mxu0 0.0
    %691 = vmatpush1.xpose.msra.mxu0 %v616
    %692 = vmatprep.subr.mxu0 0.0
    %693 = vmatpush1.xpose.msra.mxu0 %v617
    %694 = vmatprep.subr.mxu0 0.0
    %695 = vmatpush1.xpose.msra.mxu0 %v618
    %696 = vmatprep.subr.mxu0 0.0
    %697 = vmatpush1.xpose.msra.mxu0 %v619
    %698 = vmatprep.subr.mxu0 0.0
    %699 = vmatpush1.xpose.msra.mxu0 %v620
    %700 = vmatprep.subr.mxu0 0.0
    %701 = vmatpush1.xpose.msra.mxu0 %v621
    %702 = vmatprep.subr.mxu0 0.0
    %703 = vmatpush1.xpose.msra.mxu0 %v622
    %704 = vmatprep.subr.mxu0 0.0
    %705 = vmatpush1.xpose.msra.mxu0 %v623
    %706 = vmatprep.subr.mxu0 0.0
    %707 = vmatpush1.xpose.msra.mxu0 %v624
    %708 = vmatprep.subr.mxu0 0.0
    %709 = vmatpush1.xpose.msra.mxu0 %v625
    %710 = vmatprep.subr.mxu0 0.0
    %711 = vmatpush1.xpose.msra.mxu0 %v626
    %712 = vmatprep.subr.mxu0 0.0
    %713 = vmatpush1.xpose.msra.mxu0 %v627
    %714 = vmatprep.subr.mxu0 0.0
    %715 = vmatpush1.xpose.msra.mxu0 %v628
    %716 = vmatprep.subr.mxu0 0.0
    %717 = vmatpush1.xpose.msra.mxu0 %v629
    %718 = vmatprep.subr.mxu0 0.0
    %719 = vmatpush1.xpose.msra.mxu0 %v630
    %720 = vmatprep.subr.mxu0 0.0
    %721 = vmatpush1.xpose.msra.mxu0 %v631
    %722 = vmatprep.subr.mxu0 0.0
    %723 = vmatpush1.xpose.msra.mxu0 %v632
    %724 = vmatprep.mubr.f32.mxu0 0.0
    %725 = vmatmul.mubr.f32.gmra.mrb[0].mxu0 %v649
    %v726 = vpop.f32.mrb[0].mxu0
    %v727 = vadd.f32 %v659, %v726
    %v728 = vpop.f32.mrb[0].mxu0
    %v729 = vadd.f32 %v659, %v728
    %730 = vdwg.mxu0
    %731 = vmatprep.subr.mxu0 0.0
    %732 = vmatpush1.xpose.msra.mxu0 %v633
    %733 = vmatprep.subr.mxu0 0.0
    %734 = vmatpush1.xpose.msra.mxu0 %v634
    %735 = vmatprep.subr.mxu0 0.0
    %736 = vmatpush1.xpose.msra.mxu0 %v635
    %737 = vmatprep.subr.mxu0 0.0
    %738 = vmatpush1.xpose.msra.mxu0 %v636
    %739 = vmatprep.subr.mxu0 0.0
    %740 = vmatpush1.xpose.msra.mxu0 %v637
    %741 = vmatprep.subr.mxu0 0.0
    %742 = vmatpush1.xpose.msra.mxu0 %v638
    %743 = vmatprep.subr.mxu0 0.0
    %744 = vmatpush1.xpose.msra.mxu0 %v639
    %745 = vmatprep.subr.mxu0 0.0
    %746 = vmatpush1.xpose.msra.mxu0 %v640
    %747 = vmatprep.subr.mxu0 0.0
    %748 = vmatpush1.xpose.msra.mxu0 %v641
    %749 = vmatprep.subr.mxu0 0.0
    %750 = vmatpush1.xpose.msra.mxu0 %v642
    %751 = vmatprep.subr.mxu0 0.0
    %752 = vmatpush1.xpose.msra.mxu0 %v643
    %753 = vmatprep.subr.mxu0 0.0
    %754 = vmatpush1.xpose.msra.mxu0 %v644
    %755 = vmatprep.subr.mxu0 0.0
    %756 = vmatpush1.xpose.msra.mxu0 %v645
    %757 = vmatprep.subr.mxu0 0.0
    %758 = vmatpush1.xpose.msra.mxu0 %v646
    %759 = vmatprep.subr.mxu0 0.0
    %760 = vmatpush1.xpose.msra.mxu0 %v647
    %761 = vmatprep.subr.mxu0 0.0
    %762 = vmatpush1.xpose.msra.mxu0 %v648
    %763 = vmatprep.subr.mxu0 0.0
    %764 = vmatpush1.xpose.msra.mxu0 0.0
    %765 = vmatprep.subr.mxu0 0.0
    %766 = vmatpush1.xpose.msra.mxu0 0.0
    %767 = vmatprep.subr.mxu0 0.0
    %768 = vmatpush1.xpose.msra.mxu0 0.0
    %769 = vmatprep.subr.mxu0 0.0
    %770 = vmatpush1.xpose.msra.mxu0 0.0
    %771 = vmatprep.subr.mxu0 0.0
    %772 = vmatpush1.xpose.msra.mxu0 0.0
    %773 = vmatprep.subr.mxu0 0.0
    %774 = vmatpush1.xpose.msra.mxu0 0.0
    %775 = vmatprep.subr.mxu0 0.0
    %776 = vmatpush1.xpose.msra.mxu0 0.0
    %777 = vmatprep.subr.mxu0 0.0
    %778 = vmatpush1.xpose.msra.mxu0 0.0
    %779 = vmatprep.subr.mxu0 0.0
    %780 = vmatpush1.xpose.msra.mxu0 0.0
    %781 = vmatprep.subr.mxu0 0.0
    %782 = vmatpush1.xpose.msra.mxu0 0.0
    %783 = vmatprep.subr.mxu0 0.0
    %784 = vmatpush1.xpose.msra.mxu0 0.0
    %785 = vmatprep.subr.mxu0 0.0
    %786 = vmatpush1.xpose.msra.mxu0 0.0
    %787 = vmatprep.subr.mxu0 0.0
    %788 = vmatpush1.xpose.msra.mxu0 0.0
    %789 = vmatprep.subr.mxu0 0.0
    %790 = vmatpush1.xpose.msra.mxu0 0.0
    %791 = vmatprep.subr.mxu0 0.0
    %792 = vmatpush1.xpose.msra.mxu0 0.0
    %793 = vmatprep.subr.mxu0 0.0
    %794 = vmatpush1.xpose.msra.mxu0 0.0
    %795 = vmatprep.mubr.f32.mxu0 0.0
    %796 = vmatmul.mubr.f32.gmra.mrb[0].mxu0 %v649
    %v797 = vpop.f32.mrb[0].mxu0
    %v798 = vadd.f32 %v659, %v797
    %v799 = vpop.f32.mrb[0].mxu0
    %800 = vdwg.mxu0
    %v801 = vsub.f32 0.0, %v727
    %v802 = vsub.f32 0.0, %v729
    %v803 = vsub.f32 0.0, %v798
    %v804 = vmul.f32 %v801, 1.442695
    %v805 = vpow.pop %v804
    %v806 = vmul.f32 %v802, 1.442695
    %v807 = vpow.pop %v806
    %v808 = vmul.f32 %v803, 1.442695
    %v809 = vpow.pop %v808
    %v810 = vadd.f32 %v805, 1.0
    %v811 = vadd.f32 %v807, 1.0
    %v812 = vadd.f32 %v809, 1.0
    %v813 = vrcp.pop %v810
    %v814 = vrcp.pop %v811
    %v815 = vrcp.pop %v812
    %v819 = vcombine.low %v813, %v814
    %v821 = vunpack.c.l.s4 1966171168
    %v822 = vunpack.c.0.s8 %v821
    %v823 = vlaneseq
    %v824 = vshrl.u32 %v823, 7
    %v825 = vsub.s32 %v822, %v824
    %v826 = vrot.slane %v819, %v825
    %v828 = vunpack.c.l.s4 1966171168
    %v829 = vunpack.c.0.s8 %v828
    %v830 = vlaneseq
    %v831 = vshrl.u32 %v830, 7
    %v832 = vsub.s32 %v829, %v831
    %v833 = vrot.slane %v815, %v832
    %v834 = vcombine.low %v826, %v833
    %v836 = vunpack.c.l.s4 1966171168
    %v837 = vunpack.c.0.s8 %v836
    %v838 = vlaneseq
    %v839 = vshrl.u32 %v838, 7
    %v840 = vsub.s32 %v837, %v839
    %v841 = vrot.slane %v834, %v840
    %v843 = vlaneseq
    %vm844 = vcmp.ge.s32.totalorder %v843, 0
    %vm845 = vcmp.lt.s32.totalorder %v843, 384
    %vm846 = vmand %vm844, %vm845
    %847 = vst.msk [vmem:[#allocation3] sm:$0x7] %vm846, %v841
    // Predicated region
    $region22: #{tpu_custom_call.1} parent=1 // pred_check
      _
    $region23: #{tpu_custom_call.1} parent=1 // pred_check_branch
      %849 = sbr.rel (0) target = $region25
    $region24: #{tpu_custom_call.1} parent=1 // pred_region
      %s851 = ssub.s32 48, 48
      %852 = vsyncadd [#allocation4], %s851
      %s854 = sshll.u32 [#allocation3], 4
      %s855 = int_to_ptr.vmem [resolvable:$true] %s854
      %857 = dma.vmem_to_hbm [thread:$0]  %s855, 48, %s5, [#allocation4]
    $region25: #{tpu_custom_call.1} parent=1 // pred_fallthru
      _
    // Predicated region
    $region26: #{tpu_custom_call.1} parent=1 // pred_check
      _
    $region27: #{tpu_custom_call.1} parent=1 // pred_check_branch
      %859 = sbr.rel (0) target = $region29
    $region28: #{tpu_custom_call.1} parent=1 // pred_region
      %860 = dma.done [#allocation4], 48
    $region29: #{tpu_custom_call.1} parent=1 // pred_fallthru
      _
    %861 = vsyncpa [#allocation4], 1

</llo_original>
